<compile_context>
chip_gen: v5e
topology: v5e:2x2
jax: 0.10.0
libtpu: 0.0.40
codegen_flags: <defaults>
</compile_context>

<pallas_src>
import jax
import jax.numpy as jnp
from jax.experimental import pallas as pl
from jax.experimental.pallas import tpu as pltpu  # noqa: F401  (TPU backend)

EPS = 1e-5  # PyTorch BatchNorm1d default eps


def _full_spec(shape):
    """BlockSpec covering the whole array (grid=(1,))."""
    zeros = (0,) * len(shape)
    return pl.BlockSpec(shape, lambda i, z=zeros: z)


# ---------------------------------------------------------------------------
# Fused kernel: feature extractor + both head branches + softmax/log_softmax
# ---------------------------------------------------------------------------
def _damcd_kernel(x_ref, pool_ref, ws_ref, bs_ref, wf_ref, bf_ref,
                  wcat_ref, bcat_ref, bn_ref, w1l_ref, b1l_ref,
                  feat_ref, h_ref, small_ref):
    # ---- stand-in feature extractor:
    #      1x1 conv as 2-D matmul -> ReLU -> GAP via pooling matmul -> FC -> ReLU
    y = jnp.maximum(
        jnp.dot(x_ref[...], ws_ref[...], preferred_element_type=jnp.float32)
        + bs_ref[0, :], 0.0)                                        # (B*P, K)
    pooled = jnp.dot(pool_ref[...], y,
                     preferred_element_type=jnp.float32)            # (B, K)
    feat = jnp.maximum(
        jnp.dot(pooled, wf_ref[...], preferred_element_type=jnp.float32)
        + bf_ref[0, :], 0.0)                                        # (B, F)
    feat_ref[...] = feat

    # ---- head: one wide matmul against [w0_h | w1_h | w0_l | pad]
    F = feat_ref.shape[1]
    C = w1l_ref.shape[1]
    z = jnp.dot(feat, wcat_ref[...],
                preferred_element_type=jnp.float32) + bcat_ref[0, :]  # (B, 384)

    # folded BN: rows of bn_ref are [scale0, shift0, scale1, shift1]
    h0 = jnp.maximum(z[:, 0:F] * bn_ref[0, :] + bn_ref[1, :], 0.0)        # FC['0'](feat)
    h1 = jnp.maximum(z[:, F:2 * F] * bn_ref[2, :] + bn_ref[3, :], 0.0)    # FC1['0'](feat)
    x0 = z[:, 2 * F:2 * F + C]                                            # FC['logits'](feat)
    x1 = jnp.dot(h1, w1l_ref[...],
                 preferred_element_type=jnp.float32) + b1l_ref[0, :]      # FC1['logits'](h1)

    h_ref[...] = jnp.concatenate([h0, h1], axis=-1)                       # (B, 2F)

    # numerically stable softmax / log_softmax along the class axis
    def sm(v):
        m = jnp.max(v, axis=-1, keepdims=True)
        zz = v - m
        e = jnp.exp(zz)
        s = jnp.sum(e, axis=-1, keepdims=True)
        p = e * pl.reciprocal(s, approx=True)
        return p, zz - jnp.log(s)

    p0, lp0 = sm(x0)
    p1, lp1 = sm(x1)

    pieces = [x0, p0, lp0, x1, p1, lp1]
    pad = small_ref.shape[1] - 6 * C
    if pad > 0:
        pieces.append(jnp.zeros((x0.shape[0], pad), jnp.float32))
    small_ref[...] = jnp.concatenate(pieces, axis=-1)                     # (B, 128)


# ---------------------------------------------------------------------------
# Host-side parameter packing (one-time layout work, identical numerics)
# ---------------------------------------------------------------------------
def pack_params(params):
    F = params["w0_h"].shape[0]
    Hd = params["w0_h"].shape[1]
    C = params["w0_l"].shape[1]
    # PyTorch FC loop resets x0 = feat before FC['logits'], so w0_l is applied
    # directly to feat; that only type-checks if feat_dim == hidden.
    assert F == Hd, "FC['logits']-on-feat semantics require feat_dim == hidden"

    width = 2 * Hd + C
    pad = (-width) % 128
    w_cat = jnp.concatenate(
        [params["w0_h"], params["w1_h"], params["w0_l"],
         jnp.zeros((F, pad), jnp.float32)], axis=1)                  # (F, 384)
    b_cat = jnp.concatenate(
        [params["b0_h"], params["b1_h"], params["b0_l"],
         jnp.zeros((1, pad), jnp.float32)], axis=1)                  # (1, 384)

    def fold(bn):
        g, be, m, v = bn[0], bn[1], bn[2], bn[3]
        scale = g * jax.lax.rsqrt(v + EPS)
        return scale, be - m * scale

    sc0, sh0 = fold(params["bn0"])
    sc1, sh1 = fold(params["bn1"])
    bn_pack = jnp.stack([sc0, sh0, sc1, sh1])                        # (4, Hd)

    return {"w_stem": params["w_stem"], "b_stem": params["b_stem"],
            "w_fe": params["w_fe"], "b_fe": params["b_fe"],
            "w_cat": w_cat, "b_cat": b_cat, "bn_pack": bn_pack,
            "w1_l": params["w1_l"], "b1_l": params["b1_l"],
            "hidden": Hd, "num_classes": C}


def damcd_forward(x_nchw, params):
    pk = pack_params(params)
    B, Cin, Hi, Wi = x_nchw.shape
    P = Hi * Wi
    x2d = jnp.transpose(x_nchw, (0, 2, 3, 1)).reshape(B * P, Cin)    # (B*P, C)
    # pooling matrix: row b has 1/P over pixels of batch b  -> GAP as a matmul
    pool = jnp.kron(jnp.eye(B, dtype=jnp.float32),
                    jnp.full((1, P), 1.0 / P, jnp.float32))          # (B, B*P)

    Fd = pk["w_fe"].shape[1]
    Hd = pk["hidden"]
    C = pk["num_classes"]
    small_w = ((6 * C + 127) // 128) * 128

    ins = (x2d, pool, pk["w_stem"], pk["b_stem"], pk["w_fe"], pk["b_fe"],
           pk["w_cat"], pk["b_cat"], pk["bn_pack"], pk["w1_l"], pk["b1_l"])
    out_shapes = (
        jax.ShapeDtypeStruct((B, Fd), jnp.float32),       # feat
        jax.ShapeDtypeStruct((B, 2 * Hd), jnp.float32),   # [h0 | h1]
        jax.ShapeDtypeStruct((B, small_w), jnp.float32),  # [x0|p0|lp0|x1|p1|lp1|pad]
    )

    feat, h_cat, small = pl.pallas_call(
        _damcd_kernel,
        grid=(1,),
        in_specs=[_full_spec(a.shape) for a in ins],
        out_specs=tuple(_full_spec(s.shape) for s in out_shapes),
        out_shape=out_shapes,
    )(*ins)

    h0, h1 = h_cat[:, :Hd], h_cat[:, Hd:]
    x0 = small[:, 0:C]
    p0 = small[:, C:2 * C]
    lp0 = small[:, 2 * C:3 * C]
    x1 = small[:, 3 * C:4 * C]
    p1 = small[:, 4 * C:5 * C]
    lp1 = small[:, 5 * C:6 * C]
    return {"feat": feat, "0": h0, "logits": x0, "01": h1, "logits1": x1,
            "probs": p0, "log_probs": lp0, "probs1": p1, "log_probs1": lp1}


# ---------------------------------------------------------------------------
# Plain-JAX reference (for correctness check)
# ---------------------------------------------------------------------------
def ref_forward(x_nchw, params):
    B, C, H, W = x_nchw.shape
    x = jnp.transpose(x_nchw, (0, 2, 3, 1)).reshape(B, H * W, C)
    y = jnp.maximum(jnp.einsum("bpc,ck->bpk", x, params["w_stem"])
                    + params["b_stem"][0], 0.0)
    pooled = jnp.mean(y, axis=1)
    feat = jnp.maximum(pooled @ params["w_fe"] + params["b_fe"][0], 0.0)

    def bn(z, bnp):
        g, be, m, v = bnp
        return (z - m) / jnp.sqrt(v + EPS) * g + be

    h0 = jnp.maximum(bn(feat @ params["w0_h"] + params["b0_h"][0],
                        params["bn0"]), 0.0)
    x0 = feat @ params["w0_l"] + params["b0_l"][0]
    h1 = jnp.maximum(bn(feat @ params["w1_h"] + params["b1_h"][0],
                        params["bn1"]), 0.0)
    x1 = h1 @ params["w1_l"] + params["b1_l"][0]
    return {"feat": feat, "0": h0, "logits": x0, "01": h1, "logits1": x1,
            "probs": jax.nn.softmax(x0, axis=1),
            "log_probs": jax.nn.log_softmax(x0, axis=1),
            "probs1": jax.nn.softmax(x1, axis=1),
            "log_probs1": jax.nn.log_softmax(x1, axis=1)}


# ---------------------------------------------------------------------------
# Deterministic parameter init (kaiming_normal weights, zero bias, identity BN)
# ---------------------------------------------------------------------------
def init_params(key, c_in, k_stem, feat_dim, hidden, num_classes):
    ks = jax.random.split(key, 8)

    def kaiming(k, din, dout):
        return jax.random.normal(k, (din, dout), jnp.float32) * jnp.sqrt(2.0 / din)

    bn_identity = jnp.stack([jnp.ones((hidden,), jnp.float32),   # gamma
                             jnp.zeros((hidden,), jnp.float32),  # beta
                             jnp.zeros((hidden,), jnp.float32),  # running mean
                             jnp.ones((hidden,), jnp.float32)])  # running var
    return {
        # stand-in feature extractor
        "w_stem": kaiming(ks[0], c_in, k_stem),
        "b_stem": jnp.zeros((1, k_stem), jnp.float32),
        "w_fe": kaiming(ks[1], k_stem, feat_dim),
        "b_fe": jnp.zeros((1, feat_dim), jnp.float32),
        # FC branch
        "w0_h": kaiming(ks[2], feat_dim, hidden),
        "b0_h": jnp.zeros((1, hidden), jnp.float32),
        "bn0": bn_identity,
        "w0_l": kaiming(ks[3], hidden, num_classes),  # applied to feat (feat_dim==hidden)
        "b0_l": jnp.zeros((1, num_classes), jnp.float32),
        # FC1 branch
        "w1_h": kaiming(ks[4], feat_dim, hidden),
        "b1_h": jnp.zeros((1, hidden), jnp.float32),
        "bn1": bn_identity,
        "w1_l": kaiming(ks[5], hidden, num_classes),
        "b1_l": jnp.zeros((1, num_classes), jnp.float32),
    }


if __name__ == "__main__":
    B, C_IN, HIMG, WIMG = 2, 4, 16, 16
    K_STEM, FEAT_DIM, HIDDEN, NUM_CLASSES = 32, 128, 128, 16

    key = jax.random.PRNGKey(0)
    kx, kp = jax.random.split(key)
    x = jax.random.uniform(kx, (B, C_IN, HIMG, WIMG), jnp.float32)
    params = init_params(kp, C_IN, K_STEM, FEAT_DIM, HIDDEN, NUM_CLASSES)

    out = damcd_forward(x, params)
    out = jax.block_until_ready(out)

    ref = ref_forward(x, params)
    loose = {"probs", "probs1"}  # approx-reciprocal softmax denominator
    for k in ref:
        assert out[k].shape == ref[k].shape, f"shape mismatch for {k}"
        tol = 2e-3 if k in loose else 1e-4
        assert jnp.allclose(out[k], ref[k], atol=tol, rtol=tol), f"value mismatch for {k}"

    print("KERNEL_OK")
</pallas_src>

<mosaic_0001>
module attributes {stable_mosaic.version = 11 : i64} {
  func.func @_damcd_kernel(%arg0: i32, %arg1: memref<512x4xf32, #tpu.memory_space<vmem>>, %arg2: memref<2x512xf32, #tpu.memory_space<vmem>>, %arg3: memref<4x32xf32, #tpu.memory_space<vmem>>, %arg4: memref<1x32xf32, #tpu.memory_space<vmem>>, %arg5: memref<32x128xf32, #tpu.memory_space<vmem>>, %arg6: memref<1x128xf32, #tpu.memory_space<vmem>>, %arg7: memref<128x384xf32, #tpu.memory_space<vmem>>, %arg8: memref<1x384xf32, #tpu.memory_space<vmem>>, %arg9: memref<4x128xf32, #tpu.memory_space<vmem>>, %arg10: memref<128x16xf32, #tpu.memory_space<vmem>>, %arg11: memref<1x16xf32, #tpu.memory_space<vmem>>, %arg12: memref<2x128xf32, #tpu.memory_space<vmem>>, %arg13: memref<2x256xf32, #tpu.memory_space<vmem>>, %arg14: memref<2x128xf32, #tpu.memory_space<vmem>>) attributes {dimension_semantics = [#tpu.dimension_semantics<arbitrary>], iteration_bounds = array<i64: 1>, scalar_prefetch = 0 : i64, scratch_operands = 0 : i64, tpu.core_type = #tpu.core_type<tc>, window_params = [{pipeline_mode = #tpu.pipeline_mode<synchronous>, transform_indices = @transform_0, window_bounds = array<i64: 512, 4>}, {pipeline_mode = #tpu.pipeline_mode<synchronous>, transform_indices = @transform_1, window_bounds = array<i64: 2, 512>}, {pipeline_mode = #tpu.pipeline_mode<synchronous>, transform_indices = @transform_2, window_bounds = array<i64: 4, 32>}, {pipeline_mode = #tpu.pipeline_mode<synchronous>, transform_indices = @transform_3, window_bounds = array<i64: 1, 32>}, {pipeline_mode = #tpu.pipeline_mode<synchronous>, transform_indices = @transform_4, window_bounds = array<i64: 32, 128>}, {pipeline_mode = #tpu.pipeline_mode<synchronous>, transform_indices = @transform_5, window_bounds = array<i64: 1, 128>}, {pipeline_mode = #tpu.pipeline_mode<synchronous>, transform_indices = @transform_6, window_bounds = array<i64: 128, 384>}, {pipeline_mode = #tpu.pipeline_mode<synchronous>, transform_indices = @transform_7, window_bounds = array<i64: 1, 384>}, {pipeline_mode = #tpu.pipeline_mode<synchronous>, transform_indices = @transform_8, window_bounds = array<i64: 4, 128>}, {pipeline_mode = #tpu.pipeline_mode<synchronous>, transform_indices = @transform_9, window_bounds = array<i64: 128, 16>}, {pipeline_mode = #tpu.pipeline_mode<synchronous>, transform_indices = @transform_10, window_bounds = array<i64: 1, 16>}, {pipeline_mode = #tpu.pipeline_mode<synchronous>, transform_indices = @transform_11, window_bounds = array<i64: 2, 128>}, {pipeline_mode = #tpu.pipeline_mode<synchronous>, transform_indices = @transform_12, window_bounds = array<i64: 2, 256>}, {pipeline_mode = #tpu.pipeline_mode<synchronous>, transform_indices = @transform_13, window_bounds = array<i64: 2, 128>}]} {
    %c0 = arith.constant 0 : index
    %c0_0 = arith.constant 0 : index
    %0 = vector.load %arg1[%c0, %c0_0] : memref<512x4xf32, #tpu.memory_space<vmem>>, vector<512x4xf32>
    %c0_1 = arith.constant 0 : index
    %c0_2 = arith.constant 0 : index
    %1 = vector.load %arg3[%c0_1, %c0_2] : memref<4x32xf32, #tpu.memory_space<vmem>>, vector<4x32xf32>
    %cst = arith.constant dense<0.000000e+00> : vector<512x32xf32>
    %2 = tpu.matmul %0, %1, %cst {dimension_numbers = #tpu.dot_dimension_numbers<[1], [0], [0], [1], [0, 0, 1, 1], [], []>} : vector<512x4xf32>, vector<4x32xf32>, vector<512x32xf32> -> vector<512x32xf32>
    %c0_3 = arith.constant 0 : index
    %c0_4 = arith.constant 0 : index
    %3 = vector.load %arg4[%c0_3, %c0_4] : memref<1x32xf32, #tpu.memory_space<vmem>>, vector<1x32xf32>
    %4 = vector.shape_cast %3 : vector<1x32xf32> to vector<32xf32>
    %5 = vector.shape_cast %4 : vector<32xf32> to vector<1x32xf32>
    %6 = vector.broadcast %5 : vector<1x32xf32> to vector<512x32xf32>
    %7 = arith.addf %2, %6 : vector<512x32xf32>
    %cst_5 = arith.constant 0.000000e+00 : f32
    %8 = vector.broadcast %cst_5 : f32 to vector<512x32xf32>
    %9 = arith.maximumf %7, %8 : vector<512x32xf32>
    %c0_6 = arith.constant 0 : index
    %c0_7 = arith.constant 0 : index
    %10 = vector.load %arg2[%c0_6, %c0_7] : memref<2x512xf32, #tpu.memory_space<vmem>>, vector<2x512xf32>
    %cst_8 = arith.constant dense<0.000000e+00> : vector<2x32xf32>
    %11 = tpu.matmul %10, %9, %cst_8 {dimension_numbers = #tpu.dot_dimension_numbers<[1], [0], [0], [1], [0, 0, 1, 1], [], []>} : vector<2x512xf32>, vector<512x32xf32>, vector<2x32xf32> -> vector<2x32xf32>
    %c0_9 = arith.constant 0 : index
    %c0_10 = arith.constant 0 : index
    %12 = vector.load %arg5[%c0_9, %c0_10] : memref<32x128xf32, #tpu.memory_space<vmem>>, vector<32x128xf32>
    %cst_11 = arith.constant dense<0.000000e+00> : vector<2x128xf32>
    %13 = tpu.matmul %11, %12, %cst_11 {dimension_numbers = #tpu.dot_dimension_numbers<[1], [0], [0], [1], [0, 0, 1, 1], [], []>} : vector<2x32xf32>, vector<32x128xf32>, vector<2x128xf32> -> vector<2x128xf32>
    %c0_12 = arith.constant 0 : index
    %c0_13 = arith.constant 0 : index
    %14 = vector.load %arg6[%c0_12, %c0_13] : memref<1x128xf32, #tpu.memory_space<vmem>>, vector<1x128xf32>
    %15 = vector.shape_cast %14 : vector<1x128xf32> to vector<128xf32>
    %16 = vector.shape_cast %15 : vector<128xf32> to vector<1x128xf32>
    %17 = vector.broadcast %16 : vector<1x128xf32> to vector<2x128xf32>
    %18 = arith.addf %13, %17 : vector<2x128xf32>
    %cst_14 = arith.constant 0.000000e+00 : f32
    %19 = vector.broadcast %cst_14 : f32 to vector<2x128xf32>
    %20 = arith.maximumf %18, %19 : vector<2x128xf32>
    %c0_15 = arith.constant 0 : index
    %c0_16 = arith.constant 0 : index
    %21 = vector.load %arg12[%c0_15, %c0_16] : memref<2x128xf32, #tpu.memory_space<vmem>>, vector<2x128xf32>
    tpu.vector_store %arg12[%c0_15, %c0_16], %20 {strides = array<i32>} : memref<2x128xf32, #tpu.memory_space<vmem>>, vector<2x128xf32>,
    %c0_17 = arith.constant 0 : index
    %c0_18 = arith.constant 0 : index
    %22 = vector.load %arg7[%c0_17, %c0_18] : memref<128x384xf32, #tpu.memory_space<vmem>>, vector<128x384xf32>
    %cst_19 = arith.constant dense<0.000000e+00> : vector<2x384xf32>
    %23 = tpu.matmul %20, %22, %cst_19 {dimension_numbers = #tpu.dot_dimension_numbers<[1], [0], [0], [1], [0, 0, 1, 1], [], []>} : vector<2x128xf32>, vector<128x384xf32>, vector<2x384xf32> -> vector<2x384xf32>
    %c0_20 = arith.constant 0 : index
    %c0_21 = arith.constant 0 : index
    %24 = vector.load %arg8[%c0_20, %c0_21] : memref<1x384xf32, #tpu.memory_space<vmem>>, vector<1x384xf32>
    %25 = vector.shape_cast %24 : vector<1x384xf32> to vector<384xf32>
    %26 = vector.shape_cast %25 : vector<384xf32> to vector<1x384xf32>
    %27 = vector.broadcast %26 : vector<1x384xf32> to vector<2x384xf32>
    %28 = arith.addf %23, %27 : vector<2x384xf32>
    %29 = vector.extract_strided_slice %28 {offsets = [0, 0], sizes = [2, 128], strides = [1, 1]} : vector<2x384xf32> to vector<2x128xf32>
    %c0_22 = arith.constant 0 : index
    %c0_23 = arith.constant 0 : index
    %30 = vector.load %arg9[%c0_22, %c0_23] : memref<4x128xf32, #tpu.memory_space<vmem>>, vector<1x128xf32>
    %31 = vector.shape_cast %30 : vector<1x128xf32> to vector<128xf32>
    %32 = vector.shape_cast %31 : vector<128xf32> to vector<1x128xf32>
    %33 = vector.broadcast %32 : vector<1x128xf32> to vector<2x128xf32>
    %34 = arith.mulf %29, %33 : vector<2x128xf32>
    %c1 = arith.constant 1 : index
    %c0_24 = arith.constant 0 : index
    %35 = vector.load %arg9[%c1, %c0_24] : memref<4x128xf32, #tpu.memory_space<vmem>>, vector<1x128xf32>
    %36 = vector.shape_cast %35 : vector<1x128xf32> to vector<128xf32>
    %37 = vector.shape_cast %36 : vector<128xf32> to vector<1x128xf32>
    %38 = vector.broadcast %37 : vector<1x128xf32> to vector<2x128xf32>
    %39 = arith.addf %34, %38 : vector<2x128xf32>
    %cst_25 = arith.constant 0.000000e+00 : f32
    %40 = vector.broadcast %cst_25 : f32 to vector<2x128xf32>
    %41 = arith.maximumf %39, %40 : vector<2x128xf32>
    %42 = vector.extract_strided_slice %28 {offsets = [0, 128], sizes = [2, 128], strides = [1, 1]} : vector<2x384xf32> to vector<2x128xf32>
    %c2 = arith.constant 2 : index
    %c0_26 = arith.constant 0 : index
    %43 = vector.load %arg9[%c2, %c0_26] : memref<4x128xf32, #tpu.memory_space<vmem>>, vector<1x128xf32>
    %44 = vector.shape_cast %43 : vector<1x128xf32> to vector<128xf32>
    %45 = vector.shape_cast %44 : vector<128xf32> to vector<1x128xf32>
    %46 = vector.broadcast %45 : vector<1x128xf32> to vector<2x128xf32>
    %47 = arith.mulf %42, %46 : vector<2x128xf32>
    %c3 = arith.constant 3 : index
    %c0_27 = arith.constant 0 : index
    %48 = vector.load %arg9[%c3, %c0_27] : memref<4x128xf32, #tpu.memory_space<vmem>>, vector<1x128xf32>
    %49 = vector.shape_cast %48 : vector<1x128xf32> to vector<128xf32>
    %50 = vector.shape_cast %49 : vector<128xf32> to vector<1x128xf32>
    %51 = vector.broadcast %50 : vector<1x128xf32> to vector<2x128xf32>
    %52 = arith.addf %47, %51 : vector<2x128xf32>
    %cst_28 = arith.constant 0.000000e+00 : f32
    %53 = vector.broadcast %cst_28 : f32 to vector<2x128xf32>
    %54 = arith.maximumf %52, %53 : vector<2x128xf32>
    %55 = vector.extract_strided_slice %28 {offsets = [0, 256], sizes = [2, 16], strides = [1, 1]} : vector<2x384xf32> to vector<2x16xf32>
    %c0_29 = arith.constant 0 : index
    %c0_30 = arith.constant 0 : index
    %56 = vector.load %arg10[%c0_29, %c0_30] : memref<128x16xf32, #tpu.memory_space<vmem>>, vector<128x16xf32>
    %cst_31 = arith.constant dense<0.000000e+00> : vector<2x16xf32>
    %57 = tpu.matmul %54, %56, %cst_31 {dimension_numbers = #tpu.dot_dimension_numbers<[1], [0], [0], [1], [0, 0, 1, 1], [], []>} : vector<2x128xf32>, vector<128x16xf32>, vector<2x16xf32> -> vector<2x16xf32>
    %c0_32 = arith.constant 0 : index
    %c0_33 = arith.constant 0 : index
    %58 = vector.load %arg11[%c0_32, %c0_33] : memref<1x16xf32, #tpu.memory_space<vmem>>, vector<1x16xf32>
    %59 = vector.shape_cast %58 : vector<1x16xf32> to vector<16xf32>
    %60 = vector.shape_cast %59 : vector<16xf32> to vector<1x16xf32>
    %61 = vector.broadcast %60 : vector<1x16xf32> to vector<2x16xf32>
    %62 = arith.addf %57, %61 : vector<2x16xf32>
    %63 = tpu.concatenate %41, %54 in 1 : vector<2x128xf32>, vector<2x128xf32> -> vector<2x256xf32>
    %c0_34 = arith.constant 0 : index
    %c0_35 = arith.constant 0 : index
    %64 = vector.load %arg13[%c0_34, %c0_35] : memref<2x256xf32, #tpu.memory_space<vmem>>, vector<2x256xf32>
    tpu.vector_store %arg13[%c0_34, %c0_35], %63 {strides = array<i32>} : memref<2x256xf32, #tpu.memory_space<vmem>>, vector<2x256xf32>,
    %cst_36 = arith.constant dense<0xFF800000> : vector<2xf32>
    %65 = vector.multi_reduction <maximumf>, %55, %cst_36 [1] : vector<2x16xf32> to vector<2xf32>
    %66 = vector.shape_cast %65 : vector<2xf32> to vector<2x1xf32>
    %67 = vector.broadcast %66 : vector<2x1xf32> to vector<2x16xf32>
    %68 = arith.subf %55, %67 : vector<2x16xf32>
    %69 = math.exp %68 : vector<2x16xf32>
    %cst_37 = arith.constant dense<0.000000e+00> : vector<2xf32>
    %70 = vector.multi_reduction <add>, %69, %cst_37 [1] : vector<2x16xf32> to vector<2xf32>
    %71 = vector.shape_cast %70 : vector<2xf32> to vector<2x1xf32>
    %72 = tpu.reciprocal %71 {approx = true} : vector<2x1xf32> -> vector<2x1xf32>
    %73 = vector.broadcast %72 : vector<2x1xf32> to vector<2x16xf32>
    %74 = arith.mulf %69, %73 : vector<2x16xf32>
    %75 = math.log %71 : vector<2x1xf32>
    %76 = vector.broadcast %75 : vector<2x1xf32> to vector<2x16xf32>
    %77 = arith.subf %68, %76 : vector<2x16xf32>
    %cst_38 = arith.constant dense<0xFF800000> : vector<2xf32>
    %78 = vector.multi_reduction <maximumf>, %62, %cst_38 [1] : vector<2x16xf32> to vector<2xf32>
    %79 = vector.shape_cast %78 : vector<2xf32> to vector<2x1xf32>
    %80 = vector.broadcast %79 : vector<2x1xf32> to vector<2x16xf32>
    %81 = arith.subf %62, %80 : vector<2x16xf32>
    %82 = math.exp %81 : vector<2x16xf32>
    %cst_39 = arith.constant dense<0.000000e+00> : vector<2xf32>
    %83 = vector.multi_reduction <add>, %82, %cst_39 [1] : vector<2x16xf32> to vector<2xf32>
    %84 = vector.shape_cast %83 : vector<2xf32> to vector<2x1xf32>
    %85 = tpu.reciprocal %84 {approx = true} : vector<2x1xf32> -> vector<2x1xf32>
    %86 = vector.broadcast %85 : vector<2x1xf32> to vector<2x16xf32>
    %87 = arith.mulf %82, %86 : vector<2x16xf32>
    %88 = math.log %84 : vector<2x1xf32>
    %89 = vector.broadcast %88 : vector<2x1xf32> to vector<2x16xf32>
    %90 = arith.subf %81, %89 : vector<2x16xf32>
    %cst_40 = arith.constant 0.000000e+00 : f32
    %91 = vector.broadcast %cst_40 : f32 to vector<2x32xf32>
    %92 = tpu.concatenate %55, %74, %77, %62, %87, %90, %91 in 1 : vector<2x16xf32>, vector<2x16xf32>, vector<2x16xf32>, vector<2x16xf32>, vector<2x16xf32>, vector<2x16xf32>, vector<2x32xf32> -> vector<2x128xf32>
    %c0_41 = arith.constant 0 : index
    %c0_42 = arith.constant 0 : index
    %93 = vector.load %arg14[%c0_41, %c0_42] : memref<2x128xf32, #tpu.memory_space<vmem>>, vector<2x128xf32>
    tpu.vector_store %arg14[%c0_41, %c0_42], %92 {strides = array<i32>} : memref<2x128xf32, #tpu.memory_space<vmem>>, vector<2x128xf32>,
    return
  }
  func.func @transform_0(%arg0: i32) -> (i32, i32) {
    %c0_i32 = arith.constant 0 : i32
    %c0_i32_0 = arith.constant 0 : i32
    %c0_i32_1 = arith.constant 0 : i32
    return %c0_i32, %c0_i32_0 : i32, i32
  }
  func.func @transform_1(%arg0: i32) -> (i32, i32) {
    %c0_i32 = arith.constant 0 : i32
    %c0_i32_0 = arith.constant 0 : i32
    %c0_i32_1 = arith.constant 0 : i32
    return %c0_i32, %c0_i32_0 : i32, i32
  }
  func.func @transform_2(%arg0: i32) -> (i32, i32) {
    %c0_i32 = arith.constant 0 : i32
    %c0_i32_0 = arith.constant 0 : i32
    %c0_i32_1 = arith.constant 0 : i32
    return %c0_i32, %c0_i32_0 : i32, i32
  }
  func.func @transform_3(%arg0: i32) -> (i32, i32) {
    %c0_i32 = arith.constant 0 : i32
    %c0_i32_0 = arith.constant 0 : i32
    %c0_i32_1 = arith.constant 0 : i32
    return %c0_i32, %c0_i32_0 : i32, i32
  }
  func.func @transform_4(%arg0: i32) -> (i32, i32) {
    %c0_i32 = arith.constant 0 : i32
    %c0_i32_0 = arith.constant 0 : i32
    %c0_i32_1 = arith.constant 0 : i32
    return %c0_i32, %c0_i32_0 : i32, i32
  }
  func.func @transform_5(%arg0: i32) -> (i32, i32) {
    %c0_i32 = arith.constant 0 : i32
    %c0_i32_0 = arith.constant 0 : i32
    %c0_i32_1 = arith.constant 0 : i32
    return %c0_i32, %c0_i32_0 : i32, i32
  }
  func.func @transform_6(%arg0: i32) -> (i32, i32) {
    %c0_i32 = arith.constant 0 : i32
    %c0_i32_0 = arith.constant 0 : i32
    %c0_i32_1 = arith.constant 0 : i32
    return %c0_i32, %c0_i32_0 : i32, i32
  }
  func.func @transform_7(%arg0: i32) -> (i32, i32) {
    %c0_i32 = arith.constant 0 : i32
    %c0_i32_0 = arith.constant 0 : i32
    %c0_i32_1 = arith.constant 0 : i32
    return %c0_i32, %c0_i32_0 : i32, i32
  }
  func.func @transform_8(%arg0: i32) -> (i32, i32) {
    %c0_i32 = arith.constant 0 : i32
    %c0_i32_0 = arith.constant 0 : i32
    %c0_i32_1 = arith.constant 0 : i32
    return %c0_i32, %c0_i32_0 : i32, i32
  }
  func.func @transform_9(%arg0: i32) -> (i32, i32) {
    %c0_i32 = arith.constant 0 : i32
    %c0_i32_0 = arith.constant 0 : i32
    %c0_i32_1 = arith.constant 0 : i32
    return %c0_i32, %c0_i32_0 : i32, i32
  }
  func.func @transform_10(%arg0: i32) -> (i32, i32) {
    %c0_i32 = arith.constant 0 : i32
    %c0_i32_0 = arith.constant 0 : i32
    %c0_i32_1 = arith.constant 0 : i32
    return %c0_i32, %c0_i32_0 : i32, i32
  }
  func.func @transform_11(%arg0: i32) -> (i32, i32) {
    %c0_i32 = arith.constant 0 : i32
    %c0_i32_0 = arith.constant 0 : i32
    %c0_i32_1 = arith.constant 0 : i32
    return %c0_i32, %c0_i32_0 : i32, i32
  }
  func.func @transform_12(%arg0: i32) -> (i32, i32) {
    %c0_i32 = arith.constant 0 : i32
    %c0_i32_0 = arith.constant 0 : i32
    %c0_i32_1 = arith.constant 0 : i32
    return %c0_i32, %c0_i32_0 : i32, i32
  }
  func.func @transform_13(%arg0: i32) -> (i32, i32) {
    %c0_i32 = arith.constant 0 : i32
    %c0_i32_0 = arith.constant 0 : i32
    %c0_i32_1 = arith.constant 0 : i32
    return %c0_i32, %c0_i32_0 : i32, i32
  }
}

</mosaic_0001>

<llo_original>
// kernel: tpu_custom_call.1
$region0: #{tpu_custom_call.1}
  #allocation0 [shape = 'u32[]', space=smem, size = 0x4, offset = 0x4, fixed_abs, tag = 'smem constant byte address 0x4 - core index']
  #allocation1 [shape = 'u32[72,128]{1,0:T(1,128)}', space=vmem, size = 0x9000, scoped, tag = 'internal scratch']
  %s0 = inlined_call_operand.vmem [shape: f32[512,4], index: 0, kind: input, shape index: {}]
  %s1 = inlined_call_operand.vmem [shape: f32[2,512], index: 1, kind: input, shape index: {}]
  %s2 = inlined_call_operand.vmem [shape: f32[4,32], index: 2, kind: input, shape index: {}]
  %s3 = inlined_call_operand.vmem [shape: f32[1,32], index: 3, kind: input, shape index: {}]
  %s4 = inlined_call_operand.vmem [shape: f32[32,128], index: 4, kind: input, shape index: {}]
  %s5 = inlined_call_operand.vmem [shape: f32[1,128], index: 5, kind: input, shape index: {}]
  %s6 = inlined_call_operand.vmem [shape: f32[128,384], index: 6, kind: input, shape index: {}]
  %s7 = inlined_call_operand.vmem [shape: f32[1,384], index: 7, kind: input, shape index: {}]
  %s8 = inlined_call_operand.vmem [shape: f32[4,128], index: 8, kind: input, shape index: {}]
  %s9 = inlined_call_operand.vmem [shape: f32[128,16], index: 9, kind: input, shape index: {}]
  %s10 = inlined_call_operand.vmem [shape: f32[1,16], index: 10, kind: input, shape index: {}]
  %s11 = inlined_call_operand.hbm [shape: f32[2,128], index: 11, kind: output, shape index: {0}]
  %s12 = inlined_call_operand.hbm [shape: f32[2,256], index: 12, kind: output, shape index: {1}]
  %s13 = inlined_call_operand.hbm [shape: f32[2,128], index: 13, kind: output, shape index: {2}]
  %14 = xla_tuple %s11, %s12, %s13
  %s15 = sld [smem:[#allocation0]]
  $region70: #{tpu_custom_call.1} parent=0
    _
  %s17 = ssub.s32 1, %s15
  %s18 = scalar_select 0, %s17, %s15
  $region1: #{tpu_custom_call.1} parent=0
    #allocation2 [shape = 'u8[1024]{0}', space=vmem, size = 0x400, scoped, tag = 'output window, operand 0, single buffered']
    #allocation3 [shape = 's32[1]{0}', space=sflag, size = 0x4, scoped, tag = 'scoped memory for tpu_custom_call.1']
    #allocation4 [shape = 'u8[2048]{0}', space=vmem, size = 0x800, scoped, tag = 'output window, operand 1, single buffered']
    #allocation5 [shape = 's32[1]{0}', space=sflag, size = 0x4, scoped, tag = 'scoped memory for tpu_custom_call.1']
    #allocation6 [shape = 'u8[1024]{0}', space=vmem, size = 0x400, scoped, tag = 'output window, operand 2, single buffered']
    %19 = vsyncpa [#allocation3], 0
    %20 = vsyncpa [#allocation5], 0
    // Predicated region
    $region2: #{tpu_custom_call.1} parent=1 // pred_check
      _
    $region3: #{tpu_custom_call.1} parent=1 // pred_check_branch
      %22 = sbr.rel (0) target = $region5
    $region4: #{tpu_custom_call.1} parent=1 // pred_region
      _
    $region5: #{tpu_custom_call.1} parent=1 // pred_fallthru
      _
    // Predicated region
    $region6: #{tpu_custom_call.1} parent=1 // pred_check
      _
    $region7: #{tpu_custom_call.1} parent=1 // pred_check_branch
      %24 = sbr.rel (0) target = $region9
    $region8: #{tpu_custom_call.1} parent=1 // pred_region
      _
    $region9: #{tpu_custom_call.1} parent=1 // pred_fallthru
      _
    // Predicated region
    $region10: #{tpu_custom_call.1} parent=1 // pred_check
      _
    $region11: #{tpu_custom_call.1} parent=1 // pred_check_branch
      %26 = sbr.rel (0) target = $region13
    $region12: #{tpu_custom_call.1} parent=1 // pred_region
      _
    $region13: #{tpu_custom_call.1} parent=1 // pred_fallthru
      _
    // Predicated region
    $region14: #{tpu_custom_call.1} parent=1 // pred_check
      _
    $region15: #{tpu_custom_call.1} parent=1 // pred_check_branch
      %28 = sbr.rel (0) target = $region17
    $region16: #{tpu_custom_call.1} parent=1 // pred_region
      _
    $region17: #{tpu_custom_call.1} parent=1 // pred_fallthru
      _
    // Predicated region
    $region18: #{tpu_custom_call.1} parent=1 // pred_check
      _
    $region19: #{tpu_custom_call.1} parent=1 // pred_check_branch
      %30 = sbr.rel (0) target = $region21
    $region20: #{tpu_custom_call.1} parent=1 // pred_region
      _
    $region21: #{tpu_custom_call.1} parent=1 // pred_fallthru
      _
    // Predicated region
    $region22: #{tpu_custom_call.1} parent=1 // pred_check
      _
    $region23: #{tpu_custom_call.1} parent=1 // pred_check_branch
      %32 = sbr.rel (0) target = $region25
    $region24: #{tpu_custom_call.1} parent=1 // pred_region
      _
    $region25: #{tpu_custom_call.1} parent=1 // pred_fallthru
      _
    // Predicated region
    $region26: #{tpu_custom_call.1} parent=1 // pred_check
      _
    $region27: #{tpu_custom_call.1} parent=1 // pred_check_branch
      %34 = sbr.rel (0) target = $region29
    $region28: #{tpu_custom_call.1} parent=1 // pred_region
      _
    $region29: #{tpu_custom_call.1} parent=1 // pred_fallthru
      _
    // Predicated region
    $region30: #{tpu_custom_call.1} parent=1 // pred_check
      _
    $region31: #{tpu_custom_call.1} parent=1 // pred_check_branch
      %36 = sbr.rel (0) target = $region33
    $region32: #{tpu_custom_call.1} parent=1 // pred_region
      _
    $region33: #{tpu_custom_call.1} parent=1 // pred_fallthru
      _
    // Predicated region
    $region34: #{tpu_custom_call.1} parent=1 // pred_check
      _
    $region35: #{tpu_custom_call.1} parent=1 // pred_check_branch
      %38 = sbr.rel (0) target = $region37
    $region36: #{tpu_custom_call.1} parent=1 // pred_region
      _
    $region37: #{tpu_custom_call.1} parent=1 // pred_fallthru
      _
    // Predicated region
    $region38: #{tpu_custom_call.1} parent=1 // pred_check
      _
    $region39: #{tpu_custom_call.1} parent=1 // pred_check_branch
      %40 = sbr.rel (0) target = $region41
    $region40: #{tpu_custom_call.1} parent=1 // pred_region
      _
    $region41: #{tpu_custom_call.1} parent=1 // pred_fallthru
      _
    // Predicated region
    $region42: #{tpu_custom_call.1} parent=1 // pred_check
      _
    $region43: #{tpu_custom_call.1} parent=1 // pred_check_branch
      %42 = sbr.rel (0) target = $region45
    $region44: #{tpu_custom_call.1} parent=1 // pred_region
      _
    $region45: #{tpu_custom_call.1} parent=1 // pred_fallthru
      _
    %v43 = vld [vmem:[%s0] sm:$0xff]
    %v44 = vld [vmem:[%s0 + $0x8] sm:$0xff]
    %v45 = vld [vmem:[%s0 + $0x10] sm:$0xff]
    %v46 = vld [vmem:[%s0 + $0x18] sm:$0xff]
    %v47 = vld [vmem:[%s0 + $0x20] sm:$0xff]
    %v48 = vld [vmem:[%s0 + $0x28] sm:$0xff]
    %v49 = vld [vmem:[%s0 + $0x30] sm:$0xff]
    %v50 = vld [vmem:[%s0 + $0x38] sm:$0xff]
    %v51 = vld [vmem:[%s0 + $0x40] sm:$0xff]
    %v52 = vld [vmem:[%s0 + $0x48] sm:$0xff]
    %v53 = vld [vmem:[%s0 + $0x50] sm:$0xff]
    %v54 = vld [vmem:[%s0 + $0x58] sm:$0xff]
    %v55 = vld [vmem:[%s0 + $0x60] sm:$0xff]
    %v56 = vld [vmem:[%s0 + $0x68] sm:$0xff]
    %v57 = vld [vmem:[%s0 + $0x70] sm:$0xff]
    %v58 = vld [vmem:[%s0 + $0x78] sm:$0xff]
    %v59 = vld [vmem:[%s0 + $0x80] sm:$0xff]
    %v60 = vld [vmem:[%s0 + $0x88] sm:$0xff]
    %v61 = vld [vmem:[%s0 + $0x90] sm:$0xff]
    %v62 = vld [vmem:[%s0 + $0x98] sm:$0xff]
    %v63 = vld [vmem:[%s0 + $0xa0] sm:$0xff]
    %v64 = vld [vmem:[%s0 + $0xa8] sm:$0xff]
    %v65 = vld [vmem:[%s0 + $0xb0] sm:$0xff]
    %v66 = vld [vmem:[%s0 + $0xb8] sm:$0xff]
    %v67 = vld [vmem:[%s0 + $0xc0] sm:$0xff]
    %v68 = vld [vmem:[%s0 + $0xc8] sm:$0xff]
    %v69 = vld [vmem:[%s0 + $0xd0] sm:$0xff]
    %v70 = vld [vmem:[%s0 + $0xd8] sm:$0xff]
    %v71 = vld [vmem:[%s0 + $0xe0] sm:$0xff]
    %v72 = vld [vmem:[%s0 + $0xe8] sm:$0xff]
    %v73 = vld [vmem:[%s0 + $0xf0] sm:$0xff]
    %v74 = vld [vmem:[%s0 + $0xf8] sm:$0xff]
    %v75 = vld [vmem:[%s0 + $0x100] sm:$0xff]
    %v76 = vld [vmem:[%s0 + $0x108] sm:$0xff]
    %v77 = vld [vmem:[%s0 + $0x110] sm:$0xff]
    %v78 = vld [vmem:[%s0 + $0x118] sm:$0xff]
    %v79 = vld [vmem:[%s0 + $0x120] sm:$0xff]
    %v80 = vld [vmem:[%s0 + $0x128] sm:$0xff]
    %v81 = vld [vmem:[%s0 + $0x130] sm:$0xff]
    %v82 = vld [vmem:[%s0 + $0x138] sm:$0xff]
    %v83 = vld [vmem:[%s0 + $0x140] sm:$0xff]
    %v84 = vld [vmem:[%s0 + $0x148] sm:$0xff]
    %v85 = vld [vmem:[%s0 + $0x150] sm:$0xff]
    %v86 = vld [vmem:[%s0 + $0x158] sm:$0xff]
    %v87 = vld [vmem:[%s0 + $0x160] sm:$0xff]
    %v88 = vld [vmem:[%s0 + $0x168] sm:$0xff]
    %v89 = vld [vmem:[%s0 + $0x170] sm:$0xff]
    %v90 = vld [vmem:[%s0 + $0x178] sm:$0xff]
    %v91 = vld [vmem:[%s0 + $0x180] sm:$0xff]
    %v92 = vld [vmem:[%s0 + $0x188] sm:$0xff]
    %v93 = vld [vmem:[%s0 + $0x190] sm:$0xff]
    %v94 = vld [vmem:[%s0 + $0x198] sm:$0xff]
    %v95 = vld [vmem:[%s0 + $0x1a0] sm:$0xff]
    %v96 = vld [vmem:[%s0 + $0x1a8] sm:$0xff]
    %v97 = vld [vmem:[%s0 + $0x1b0] sm:$0xff]
    %v98 = vld [vmem:[%s0 + $0x1b8] sm:$0xff]
    %v99 = vld [vmem:[%s0 + $0x1c0] sm:$0xff]
    %v100 = vld [vmem:[%s0 + $0x1c8] sm:$0xff]
    %v101 = vld [vmem:[%s0 + $0x1d0] sm:$0xff]
    %v102 = vld [vmem:[%s0 + $0x1d8] sm:$0xff]
    %v103 = vld [vmem:[%s0 + $0x1e0] sm:$0xff]
    %v104 = vld [vmem:[%s0 + $0x1e8] sm:$0xff]
    %v105 = vld [vmem:[%s0 + $0x1f0] sm:$0xff]
    %v106 = vld [vmem:[%s0 + $0x1f8] sm:$0xff]
    %v107 = vld [vmem:[%s2] sm:$0xf]
    %v108 = vld [vmem:[%s3] sm:$0x1]
    %v110 = vperm.slane %v108, 0
    %vm112 = vcmask 31744
    %v114 = vsel %vm112, %v43, 0
    %v117 = vsel %vm112, %v44, 0
    %v120 = vsel %vm112, %v45, 0
    %v123 = vsel %vm112, %v46, 0
    %v126 = vsel %vm112, %v47, 0
    %v129 = vsel %vm112, %v48, 0
    %v132 = vsel %vm112, %v49, 0
    %v135 = vsel %vm112, %v50, 0
    %v138 = vsel %vm112, %v51, 0
    %v141 = vsel %vm112, %v52, 0
    %v144 = vsel %vm112, %v53, 0
    %v147 = vsel %vm112, %v54, 0
    %v150 = vsel %vm112, %v55, 0
    %v153 = vsel %vm112, %v56, 0
    %v156 = vsel %vm112, %v57, 0
    %v159 = vsel %vm112, %v58, 0
    %v162 = vsel %vm112, %v59, 0
    %v165 = vsel %vm112, %v60, 0
    %v168 = vsel %vm112, %v61, 0
    %v171 = vsel %vm112, %v62, 0
    %v174 = vsel %vm112, %v63, 0
    %v177 = vsel %vm112, %v64, 0
    %v180 = vsel %vm112, %v65, 0
    %v183 = vsel %vm112, %v66, 0
    %v186 = vsel %vm112, %v67, 0
    %v189 = vsel %vm112, %v68, 0
    %v192 = vsel %vm112, %v69, 0
    %v195 = vsel %vm112, %v70, 0
    %v198 = vsel %vm112, %v71, 0
    %v201 = vsel %vm112, %v72, 0
    %v204 = vsel %vm112, %v73, 0
    %v207 = vsel %vm112, %v74, 0
    %v210 = vsel %vm112, %v75, 0
    %v213 = vsel %vm112, %v76, 0
    %v216 = vsel %vm112, %v77, 0
    %v219 = vsel %vm112, %v78, 0
    %v222 = vsel %vm112, %v79, 0
    %v225 = vsel %vm112, %v80, 0
    %v228 = vsel %vm112, %v81, 0
    %v231 = vsel %vm112, %v82, 0
    %v234 = vsel %vm112, %v83, 0
    %v237 = vsel %vm112, %v84, 0
    %v240 = vsel %vm112, %v85, 0
    %v243 = vsel %vm112, %v86, 0
    %v246 = vsel %vm112, %v87, 0
    %v249 = vsel %vm112, %v88, 0
    %v252 = vsel %vm112, %v89, 0
    %v255 = vsel %vm112, %v90, 0
    %v258 = vsel %vm112, %v91, 0
    %v261 = vsel %vm112, %v92, 0
    %v264 = vsel %vm112, %v93, 0
    %v267 = vsel %vm112, %v94, 0
    %v270 = vsel %vm112, %v95, 0
    %v273 = vsel %vm112, %v96, 0
    %v276 = vsel %vm112, %v97, 0
    %v279 = vsel %vm112, %v98, 0
    %v282 = vsel %vm112, %v99, 0
    %v285 = vsel %vm112, %v100, 0
    %v288 = vsel %vm112, %v101, 0
    %v291 = vsel %vm112, %v102, 0
    %v294 = vsel %vm112, %v103, 0
    %v297 = vsel %vm112, %v104, 0
    %v300 = vsel %vm112, %v105, 0
    %v303 = vsel %vm112, %v106, 0
    %vm305 = vcmask 1043456
    %v307 = vsel %vm305, %v107, 0
    %309 = vmatpush.msra.mxu0 0.0
    %310 = vmatpush.msra.mxu0 0.0
    %311 = vmatpush.msra.mxu0 0.0
    %312 = vmatpush.msra.mxu0 0.0
    %313 = vmatpush.msra.mxu0 0.0
    %314 = vmatpush.msra.mxu0 0.0
    %315 = vmatpush.msra.mxu0 0.0
    %316 = vmatpush.msra.mxu0 0.0
    %317 = vmatpush.msra.mxu0 0.0
    %318 = vmatpush.msra.mxu0 0.0
    %319 = vmatpush.msra.mxu0 0.0
    %320 = vmatpush.msra.mxu0 0.0
    %321 = vmatpush.msra.mxu0 0.0
    %322 = vmatpush.msra.mxu0 0.0
    %323 = vmatpush.msra.mxu0 0.0
    %324 = vmatpush.msra.mxu0 %v307
    %325 = vmatmul.f32.gmra.mxu0 %v114
    %v326 = vpop.f32.mrf.mxu0
    %v327 = vadd.f32 %v110, %v326
    %328 = vmatmul.f32.gmra.mxu0 %v117
    %v329 = vpop.f32.mrf.mxu0
    %v330 = vadd.f32 %v110, %v329
    %331 = vmatmul.f32.gmra.mxu0 %v120
    %v332 = vpop.f32.mrf.mxu0
    %v333 = vadd.f32 %v110, %v332
    %334 = vmatmul.f32.gmra.mxu0 %v123
    %v335 = vpop.f32.mrf.mxu0
    %v336 = vadd.f32 %v110, %v335
    %337 = vmatmul.f32.gmra.mxu0 %v126
    %v338 = vpop.f32.mrf.mxu0
    %v339 = vadd.f32 %v110, %v338
    %340 = vmatmul.f32.gmra.mxu0 %v129
    %v341 = vpop.f32.mrf.mxu0
    %v342 = vadd.f32 %v110, %v341
    %343 = vmatmul.f32.gmra.mxu0 %v132
    %v344 = vpop.f32.mrf.mxu0
    %v345 = vadd.f32 %v110, %v344
    %346 = vmatmul.f32.gmra.mxu0 %v135
    %v347 = vpop.f32.mrf.mxu0
    %v348 = vadd.f32 %v110, %v347
    %349 = vmatmul.f32.gmra.mxu0 %v138
    %v350 = vpop.f32.mrf.mxu0
    %v351 = vadd.f32 %v110, %v350
    %352 = vmatmul.f32.gmra.mxu0 %v141
    %v353 = vpop.f32.mrf.mxu0
    %v354 = vadd.f32 %v110, %v353
    %355 = vmatmul.f32.gmra.mxu0 %v144
    %v356 = vpop.f32.mrf.mxu0
    %v357 = vadd.f32 %v110, %v356
    %358 = vmatmul.f32.gmra.mxu0 %v147
    %v359 = vpop.f32.mrf.mxu0
    %v360 = vadd.f32 %v110, %v359
    %361 = vmatmul.f32.gmra.mxu0 %v150
    %v362 = vpop.f32.mrf.mxu0
    %v363 = vadd.f32 %v110, %v362
    %364 = vmatmul.f32.gmra.mxu0 %v153
    %v365 = vpop.f32.mrf.mxu0
    %v366 = vadd.f32 %v110, %v365
    %367 = vmatmul.f32.gmra.mxu0 %v156
    %v368 = vpop.f32.mrf.mxu0
    %v369 = vadd.f32 %v110, %v368
    %370 = vmatmul.f32.gmra.mxu0 %v159
    %v371 = vpop.f32.mrf.mxu0
    %v372 = vadd.f32 %v110, %v371
    %373 = vmatmul.f32.gmra.mxu0 %v162
    %v374 = vpop.f32.mrf.mxu0
    %v375 = vadd.f32 %v110, %v374
    %376 = vmatmul.f32.gmra.mxu0 %v165
    %v377 = vpop.f32.mrf.mxu0
    %v378 = vadd.f32 %v110, %v377
    %379 = vmatmul.f32.gmra.mxu0 %v168
    %v380 = vpop.f32.mrf.mxu0
    %v381 = vadd.f32 %v110, %v380
    %382 = vmatmul.f32.gmra.mxu0 %v171
    %v383 = vpop.f32.mrf.mxu0
    %v384 = vadd.f32 %v110, %v383
    %385 = vmatmul.f32.gmra.mxu0 %v174
    %v386 = vpop.f32.mrf.mxu0
    %v387 = vadd.f32 %v110, %v386
    %388 = vmatmul.f32.gmra.mxu0 %v177
    %v389 = vpop.f32.mrf.mxu0
    %v390 = vadd.f32 %v110, %v389
    %391 = vmatmul.f32.gmra.mxu0 %v180
    %v392 = vpop.f32.mrf.mxu0
    %v393 = vadd.f32 %v110, %v392
    %394 = vmatmul.f32.gmra.mxu0 %v183
    %v395 = vpop.f32.mrf.mxu0
    %v396 = vadd.f32 %v110, %v395
    %397 = vmatmul.f32.gmra.mxu0 %v186
    %v398 = vpop.f32.mrf.mxu0
    %v399 = vadd.f32 %v110, %v398
    %400 = vmatmul.f32.gmra.mxu0 %v189
    %v401 = vpop.f32.mrf.mxu0
    %v402 = vadd.f32 %v110, %v401
    %403 = vmatmul.f32.gmra.mxu0 %v192
    %v404 = vpop.f32.mrf.mxu0
    %v405 = vadd.f32 %v110, %v404
    %406 = vmatmul.f32.gmra.mxu0 %v195
    %v407 = vpop.f32.mrf.mxu0
    %v408 = vadd.f32 %v110, %v407
    %409 = vmatmul.f32.gmra.mxu0 %v198
    %v410 = vpop.f32.mrf.mxu0
    %v411 = vadd.f32 %v110, %v410
    %412 = vmatmul.f32.gmra.mxu0 %v201
    %v413 = vpop.f32.mrf.mxu0
    %v414 = vadd.f32 %v110, %v413
    %415 = vmatmul.f32.gmra.mxu0 %v204
    %v416 = vpop.f32.mrf.mxu0
    %v417 = vadd.f32 %v110, %v416
    %418 = vmatmul.f32.gmra.mxu0 %v207
    %v419 = vpop.f32.mrf.mxu0
    %v420 = vadd.f32 %v110, %v419
    %421 = vmatmul.f32.gmra.mxu0 %v210
    %v422 = vpop.f32.mrf.mxu0
    %v423 = vadd.f32 %v110, %v422
    %424 = vmatmul.f32.gmra.mxu0 %v213
    %v425 = vpop.f32.mrf.mxu0
    %v426 = vadd.f32 %v110, %v425
    %427 = vmatmul.f32.gmra.mxu0 %v216
    %v428 = vpop.f32.mrf.mxu0
    %v429 = vadd.f32 %v110, %v428
    %430 = vmatmul.f32.gmra.mxu0 %v219
    %v431 = vpop.f32.mrf.mxu0
    %v432 = vadd.f32 %v110, %v431
    %433 = vmatmul.f32.gmra.mxu0 %v222
    %v434 = vpop.f32.mrf.mxu0
    %v435 = vadd.f32 %v110, %v434
    %436 = vmatmul.f32.gmra.mxu0 %v225
    %v437 = vpop.f32.mrf.mxu0
    %v438 = vadd.f32 %v110, %v437
    %439 = vmatmul.f32.gmra.mxu0 %v228
    %v440 = vpop.f32.mrf.mxu0
    %v441 = vadd.f32 %v110, %v440
    %442 = vmatmul.f32.gmra.mxu0 %v231
    %v443 = vpop.f32.mrf.mxu0
    %v444 = vadd.f32 %v110, %v443
    %445 = vmatmul.f32.gmra.mxu0 %v234
    %v446 = vpop.f32.mrf.mxu0
    %v447 = vadd.f32 %v110, %v446
    %448 = vmatmul.f32.gmra.mxu0 %v237
    %v449 = vpop.f32.mrf.mxu0
    %v450 = vadd.f32 %v110, %v449
    %451 = vmatmul.f32.gmra.mxu0 %v240
    %v452 = vpop.f32.mrf.mxu0
    %v453 = vadd.f32 %v110, %v452
    %454 = vmatmul.f32.gmra.mxu0 %v243
    %v455 = vpop.f32.mrf.mxu0
    %v456 = vadd.f32 %v110, %v455
    %457 = vmatmul.f32.gmra.mxu0 %v246
    %v458 = vpop.f32.mrf.mxu0
    %v459 = vadd.f32 %v110, %v458
    %460 = vmatmul.f32.gmra.mxu0 %v249
    %v461 = vpop.f32.mrf.mxu0
    %v462 = vadd.f32 %v110, %v461
    %463 = vmatmul.f32.gmra.mxu0 %v252
    %v464 = vpop.f32.mrf.mxu0
    %v465 = vadd.f32 %v110, %v464
    %466 = vmatmul.f32.gmra.mxu0 %v255
    %v467 = vpop.f32.mrf.mxu0
    %v468 = vadd.f32 %v110, %v467
    %469 = vmatmul.f32.gmra.mxu0 %v258
    %v470 = vpop.f32.mrf.mxu0
    %v471 = vadd.f32 %v110, %v470
    %472 = vmatmul.f32.gmra.mxu0 %v261
    %v473 = vpop.f32.mrf.mxu0
    %v474 = vadd.f32 %v110, %v473
    %475 = vmatmul.f32.gmra.mxu0 %v264
    %v476 = vpop.f32.mrf.mxu0
    %v477 = vadd.f32 %v110, %v476
    %478 = vmatmul.f32.gmra.mxu0 %v267
    %v479 = vpop.f32.mrf.mxu0
    %v480 = vadd.f32 %v110, %v479
    %481 = vmatmul.f32.gmra.mxu0 %v270
    %v482 = vpop.f32.mrf.mxu0
    %v483 = vadd.f32 %v110, %v482
    %484 = vmatmul.f32.gmra.mxu0 %v273
    %v485 = vpop.f32.mrf.mxu0
    %v486 = vadd.f32 %v110, %v485
    %487 = vmatmul.f32.gmra.mxu0 %v276
    %v488 = vpop.f32.mrf.mxu0
    %v489 = vadd.f32 %v110, %v488
    %490 = vmatmul.f32.gmra.mxu0 %v279
    %v491 = vpop.f32.mrf.mxu0
    %v492 = vadd.f32 %v110, %v491
    %493 = vmatmul.f32.gmra.mxu0 %v282
    %v494 = vpop.f32.mrf.mxu0
    %v495 = vadd.f32 %v110, %v494
    %496 = vmatmul.f32.gmra.mxu0 %v285
    %v497 = vpop.f32.mrf.mxu0
    %v498 = vadd.f32 %v110, %v497
    %499 = vmatmul.f32.gmra.mxu0 %v288
    %v500 = vpop.f32.mrf.mxu0
    %v501 = vadd.f32 %v110, %v500
    %502 = vmatmul.f32.gmra.mxu0 %v291
    %v503 = vpop.f32.mrf.mxu0
    %v504 = vadd.f32 %v110, %v503
    %505 = vmatmul.f32.gmra.mxu0 %v294
    %v506 = vpop.f32.mrf.mxu0
    %v507 = vadd.f32 %v110, %v506
    %508 = vmatmul.f32.gmra.mxu0 %v297
    %v509 = vpop.f32.mrf.mxu0
    %v510 = vadd.f32 %v110, %v509
    %511 = vmatmul.f32.gmra.mxu0 %v300
    %v512 = vpop.f32.mrf.mxu0
    %v513 = vadd.f32 %v110, %v512
    %514 = vmatmul.f32.gmra.mxu0 %v303
    %v515 = vpop.f32.mrf.mxu0
    %v516 = vadd.f32 %v110, %v515
    %517 = vdwg.mxu0
    %v518 = vmax.f32 %v327, 0.0
    %v519 = vmax.f32 %v330, 0.0
    %v520 = vmax.f32 %v333, 0.0
    %v521 = vmax.f32 %v336, 0.0
    %v522 = vmax.f32 %v339, 0.0
    %v523 = vmax.f32 %v342, 0.0
    %v524 = vmax.f32 %v345, 0.0
    %v525 = vmax.f32 %v348, 0.0
    %v526 = vmax.f32 %v351, 0.0
    %v527 = vmax.f32 %v354, 0.0
    %v528 = vmax.f32 %v357, 0.0
    %v529 = vmax.f32 %v360, 0.0
    %v530 = vmax.f32 %v363, 0.0
    %v531 = vmax.f32 %v366, 0.0
    %v532 = vmax.f32 %v369, 0.0
    %v533 = vmax.f32 %v372, 0.0
    %v534 = vmax.f32 %v375, 0.0
    %v535 = vmax.f32 %v378, 0.0
    %v536 = vmax.f32 %v381, 0.0
    %v537 = vmax.f32 %v384, 0.0
    %v538 = vmax.f32 %v387, 0.0
    %v539 = vmax.f32 %v390, 0.0
    %v540 = vmax.f32 %v393, 0.0
    %v541 = vmax.f32 %v396, 0.0
    %v542 = vmax.f32 %v399, 0.0
    %v543 = vmax.f32 %v402, 0.0
    %v544 = vmax.f32 %v405, 0.0
    %v545 = vmax.f32 %v408, 0.0
    %v546 = vmax.f32 %v411, 0.0
    %v547 = vmax.f32 %v414, 0.0
    %v548 = vmax.f32 %v417, 0.0
    %v549 = vmax.f32 %v420, 0.0
    %v550 = vmax.f32 %v423, 0.0
    %v551 = vmax.f32 %v426, 0.0
    %v552 = vmax.f32 %v429, 0.0
    %v553 = vmax.f32 %v432, 0.0
    %v554 = vmax.f32 %v435, 0.0
    %v555 = vmax.f32 %v438, 0.0
    %v556 = vmax.f32 %v441, 0.0
    %v557 = vmax.f32 %v444, 0.0
    %v558 = vmax.f32 %v447, 0.0
    %v559 = vmax.f32 %v450, 0.0
    %v560 = vmax.f32 %v453, 0.0
    %v561 = vmax.f32 %v456, 0.0
    %v562 = vmax.f32 %v459, 0.0
    %v563 = vmax.f32 %v462, 0.0
    %v564 = vmax.f32 %v465, 0.0
    %v565 = vmax.f32 %v468, 0.0
    %v566 = vmax.f32 %v471, 0.0
    %v567 = vmax.f32 %v474, 0.0
    %v568 = vmax.f32 %v477, 0.0
    %v569 = vmax.f32 %v480, 0.0
    %v570 = vmax.f32 %v483, 0.0
    %v571 = vmax.f32 %v486, 0.0
    %v572 = vmax.f32 %v489, 0.0
    %v573 = vmax.f32 %v492, 0.0
    %v574 = vmax.f32 %v495, 0.0
    %v575 = vmax.f32 %v498, 0.0
    %v576 = vmax.f32 %v501, 0.0
    %v577 = vmax.f32 %v504, 0.0
    %v578 = vmax.f32 %v507, 0.0
    %v579 = vmax.f32 %v510, 0.0
    %v580 = vmax.f32 %v513, 0.0
    %v581 = vmax.f32 %v516, 0.0
    %v582 = vld [vmem:[%s1] sm:$0xff]
    %584 = vst [vmem:[#allocation1] ss:$4 sm:$0xff] %v582
    %v585 = vld.sshfl [vmem:[#allocation1] sm:$0xff pattern:$0x73625140]
    %v586 = vld.sshfl [vmem:[#allocation1 + $0x8] sm:$0xff pattern:$0x73625140]
    %v587 = vld.sshfl [vmem:[#allocation1 + $0x10] sm:$0xff pattern:$0x73625140]
    %v588 = vld.sshfl [vmem:[#allocation1 + $0x18] sm:$0xff pattern:$0x73625140]
    %593 = vmatpush.msra.mxu0 %v533
    %594 = vmatpush.msra.mxu0 %v532
    %595 = vmatpush.msra.mxu0 %v531
    %596 = vmatpush.msra.mxu0 %v530
    %597 = vmatpush.msra.mxu0 %v529
    %598 = vmatpush.msra.mxu0 %v528
    %599 = vmatpush.msra.mxu0 %v527
    %600 = vmatpush.msra.mxu0 %v526
    %601 = vmatpush.msra.mxu0 %v525
    %602 = vmatpush.msra.mxu0 %v524
    %603 = vmatpush.msra.mxu0 %v523
    %604 = vmatpush.msra.mxu0 %v522
    %605 = vmatpush.msra.mxu0 %v521
    %606 = vmatpush.msra.mxu0 %v520
    %607 = vmatpush.msra.mxu0 %v519
    %608 = vmatpush.msra.mxu0 %v518
    %609 = vmatmul.f32.gmra.mxu0 %v585
    %v610 = vpop.f32.mrf.mxu0
    %v611 = vadd.f32 0.0, %v610
    %612 = vdwg.mxu0
    %613 = vmatpush.msra.mxu0 %v549
    %614 = vmatpush.msra.mxu0 %v548
    %615 = vmatpush.msra.mxu0 %v547
    %616 = vmatpush.msra.mxu0 %v546
    %617 = vmatpush.msra.mxu0 %v545
    %618 = vmatpush.msra.mxu0 %v544
    %619 = vmatpush.msra.mxu0 %v543
    %620 = vmatpush.msra.mxu0 %v542
    %621 = vmatpush.msra.mxu0 %v541
    %622 = vmatpush.msra.mxu0 %v540
    %623 = vmatpush.msra.mxu0 %v539
    %624 = vmatpush.msra.mxu0 %v538
    %625 = vmatpush.msra.mxu0 %v537
    %626 = vmatpush.msra.mxu0 %v536
    %627 = vmatpush.msra.mxu0 %v535
    %628 = vmatpush.msra.mxu0 %v534
    %629 = vmatmul.f32.gmra.mxu0 %v586
    %v630 = vpop.f32.mrf.mxu0
    %v631 = vadd.f32 %v611, %v630
    %632 = vdwg.mxu0
    %633 = vmatpush.msra.mxu0 %v565
    %634 = vmatpush.msra.mxu0 %v564
    %635 = vmatpush.msra.mxu0 %v563
    %636 = vmatpush.msra.mxu0 %v562
    %637 = vmatpush.msra.mxu0 %v561
    %638 = vmatpush.msra.mxu0 %v560
    %639 = vmatpush.msra.mxu0 %v559
    %640 = vmatpush.msra.mxu0 %v558
    %641 = vmatpush.msra.mxu0 %v557
    %642 = vmatpush.msra.mxu0 %v556
    %643 = vmatpush.msra.mxu0 %v555
    %644 = vmatpush.msra.mxu0 %v554
    %645 = vmatpush.msra.mxu0 %v553
    %646 = vmatpush.msra.mxu0 %v552
    %647 = vmatpush.msra.mxu0 %v551
    %648 = vmatpush.msra.mxu0 %v550
    %649 = vmatmul.f32.gmra.mxu0 %v587
    %v650 = vpop.f32.mrf.mxu0
    %v651 = vadd.f32 %v631, %v650
    %652 = vdwg.mxu0
    %653 = vmatpush.msra.mxu0 %v581
    %654 = vmatpush.msra.mxu0 %v580
    %655 = vmatpush.msra.mxu0 %v579
    %656 = vmatpush.msra.mxu0 %v578
    %657 = vmatpush.msra.mxu0 %v577
    %658 = vmatpush.msra.mxu0 %v576
    %659 = vmatpush.msra.mxu0 %v575
    %660 = vmatpush.msra.mxu0 %v574
    %661 = vmatpush.msra.mxu0 %v573
    %662 = vmatpush.msra.mxu0 %v572
    %663 = vmatpush.msra.mxu0 %v571
    %664 = vmatpush.msra.mxu0 %v570
    %665 = vmatpush.msra.mxu0 %v569
    %666 = vmatpush.msra.mxu0 %v568
    %667 = vmatpush.msra.mxu0 %v567
    %668 = vmatpush.msra.mxu0 %v566
    %669 = vmatmul.f32.gmra.mxu0 %v588
    %v670 = vpop.f32.mrf.mxu0
    %v671 = vadd.f32 %v651, %v670
    %672 = vdwg.mxu0
    %v673 = vld [vmem:[%s4] sm:$0xff]
    %v674 = vld [vmem:[%s4 + $0x8] sm:$0xff]
    %v675 = vld [vmem:[%s4 + $0x10] sm:$0xff]
    %v676 = vld [vmem:[%s4 + $0x18] sm:$0xff]
    %v677 = vld [vmem:[%s5] sm:$0x1]
    %v679 = vperm.slane %v677, 0
    %vm681 = vcmask 261120
    %v683 = vsel %vm681, %v671, 0
    %685 = vmatpush.msra.mxu0 0.0
    %686 = vmatpush.msra.mxu0 0.0
    %687 = vmatpush.msra.mxu0 0.0
    %688 = vmatpush.msra.mxu0 0.0
    %689 = vmatpush.msra.mxu0 0.0
    %690 = vmatpush.msra.mxu0 0.0
    %691 = vmatpush.msra.mxu0 0.0
    %692 = vmatpush.msra.mxu0 0.0
    %693 = vmatpush.msra.mxu0 0.0
    %694 = vmatpush.msra.mxu0 0.0
    %695 = vmatpush.msra.mxu0 0.0
    %696 = vmatpush.msra.mxu0 0.0
    %697 = vmatpush.msra.mxu0 %v676
    %698 = vmatpush.msra.mxu0 %v675
    %699 = vmatpush.msra.mxu0 %v674
    %700 = vmatpush.msra.mxu0 %v673
    %701 = vmatmul.f32.gmra.mxu0 %v683
    %v702 = vpop.f32.mrf.mxu0
    %v703 = vadd.f32 %v679, %v702
    %704 = vdwg.mxu0
    %v705 = vmax.f32 %v703, 0.0
    %706 = vst [vmem:[#allocation2] sm:$0x3] %v705
    %v707 = vld [vmem:[%s6] sm:$0xff]
    %v708 = vld [vmem:[%s6 + $0x8] sm:$0xff]
    %v709 = vld [vmem:[%s6 + $0x10] sm:$0xff]
    %v710 = vld [vmem:[%s6 + $0x18] sm:$0xff]
    %v711 = vld [vmem:[%s6 + $0x20] sm:$0xff]
    %v712 = vld [vmem:[%s6 + $0x28] sm:$0xff]
    %v713 = vld [vmem:[%s6 + $0x30] sm:$0xff]
    %v714 = vld [vmem:[%s6 + $0x38] sm:$0xff]
    %v715 = vld [vmem:[%s6 + $0x40] sm:$0xff]
    %v716 = vld [vmem:[%s6 + $0x48] sm:$0xff]
    %v717 = vld [vmem:[%s6 + $0x50] sm:$0xff]
    %v718 = vld [vmem:[%s6 + $0x58] sm:$0xff]
    %v719 = vld [vmem:[%s6 + $0x60] sm:$0xff]
    %v720 = vld [vmem:[%s6 + $0x68] sm:$0xff]
    %v721 = vld [vmem:[%s6 + $0x70] sm:$0xff]
    %v722 = vld [vmem:[%s6 + $0x78] sm:$0xff]
    %v723 = vld [vmem:[%s6 + $0x80] sm:$0xff]
    %v724 = vld [vmem:[%s6 + $0x88] sm:$0xff]
    %v725 = vld [vmem:[%s6 + $0x90] sm:$0xff]
    %v726 = vld [vmem:[%s6 + $0x98] sm:$0xff]
    %v727 = vld [vmem:[%s6 + $0xa0] sm:$0xff]
    %v728 = vld [vmem:[%s6 + $0xa8] sm:$0xff]
    %v729 = vld [vmem:[%s6 + $0xb0] sm:$0xff]
    %v730 = vld [vmem:[%s6 + $0xb8] sm:$0xff]
    %v731 = vld [vmem:[%s6 + $0xc0] sm:$0xff]
    %v732 = vld [vmem:[%s6 + $0xc8] sm:$0xff]
    %v733 = vld [vmem:[%s6 + $0xd0] sm:$0xff]
    %v734 = vld [vmem:[%s6 + $0xd8] sm:$0xff]
    %v735 = vld [vmem:[%s6 + $0xe0] sm:$0xff]
    %v736 = vld [vmem:[%s6 + $0xe8] sm:$0xff]
    %v737 = vld [vmem:[%s6 + $0xf0] sm:$0xff]
    %v738 = vld [vmem:[%s6 + $0xf8] sm:$0xff]
    %v739 = vld [vmem:[%s6 + $0x100] sm:$0xff]
    %v740 = vld [vmem:[%s6 + $0x108] sm:$0xff]
    %v741 = vld [vmem:[%s6 + $0x110] sm:$0xff]
    %v742 = vld [vmem:[%s6 + $0x118] sm:$0xff]
    %v743 = vld [vmem:[%s6 + $0x120] sm:$0xff]
    %v744 = vld [vmem:[%s6 + $0x128] sm:$0xff]
    %v745 = vld [vmem:[%s6 + $0x130] sm:$0xff]
    %v746 = vld [vmem:[%s6 + $0x138] sm:$0xff]
    %v747 = vld [vmem:[%s6 + $0x140] sm:$0xff]
    %v748 = vld [vmem:[%s6 + $0x148] sm:$0xff]
    %v749 = vld [vmem:[%s6 + $0x150] sm:$0xff]
    %v750 = vld [vmem:[%s6 + $0x158] sm:$0xff]
    %v751 = vld [vmem:[%s6 + $0x160] sm:$0xff]
    %v752 = vld [vmem:[%s6 + $0x168] sm:$0xff]
    %v753 = vld [vmem:[%s6 + $0x170] sm:$0xff]
    %v754 = vld [vmem:[%s6 + $0x178] sm:$0xff]
    %v755 = vld [vmem:[%s7] sm:$0x7]
    %v757 = vperm.slane %v755, 0
    %v758 = vperm.slane %v755, 1
    %v759 = vperm.slane %v755, 2
    %763 = vmatpush.msra.mxu0 %v752
    %764 = vmatpush.msra.mxu0 %v749
    %765 = vmatpush.msra.mxu0 %v746
    %766 = vmatpush.msra.mxu0 %v743
    %767 = vmatpush.msra.mxu0 %v740
    %768 = vmatpush.msra.mxu0 %v737
    %769 = vmatpush.msra.mxu0 %v734
    %770 = vmatpush.msra.mxu0 %v731
    %771 = vmatpush.msra.mxu0 %v728
    %772 = vmatpush.msra.mxu0 %v725
    %773 = vmatpush.msra.mxu0 %v722
    %774 = vmatpush.msra.mxu0 %v719
    %775 = vmatpush.msra.mxu0 %v716
    %776 = vmatpush.msra.mxu0 %v713
    %777 = vmatpush.msra.mxu0 %v710
    %778 = vmatpush.msra.mxu0 %v707
    %779 = vmatmul.f32.gmra.mxu0 %v705
    %v780 = vpop.f32.mrf.mxu0
    %v781 = vadd.f32 %v757, %v780
    %782 = vdwg.mxu0
    %783 = vmatpush.msra.mxu0 %v753
    %784 = vmatpush.msra.mxu0 %v750
    %785 = vmatpush.msra.mxu0 %v747
    %786 = vmatpush.msra.mxu0 %v744
    %787 = vmatpush.msra.mxu0 %v741
    %788 = vmatpush.msra.mxu0 %v738
    %789 = vmatpush.msra.mxu0 %v735
    %790 = vmatpush.msra.mxu0 %v732
    %791 = vmatpush.msra.mxu0 %v729
    %792 = vmatpush.msra.mxu0 %v726
    %793 = vmatpush.msra.mxu0 %v723
    %794 = vmatpush.msra.mxu0 %v720
    %795 = vmatpush.msra.mxu0 %v717
    %796 = vmatpush.msra.mxu0 %v714
    %797 = vmatpush.msra.mxu0 %v711
    %798 = vmatpush.msra.mxu0 %v708
    %799 = vmatmul.f32.gmra.mxu0 %v705
    %v800 = vpop.f32.mrf.mxu0
    %v801 = vadd.f32 %v758, %v800
    %802 = vdwg.mxu0
    %803 = vmatpush.msra.mxu0 %v754
    %804 = vmatpush.msra.mxu0 %v751
    %805 = vmatpush.msra.mxu0 %v748
    %806 = vmatpush.msra.mxu0 %v745
    %807 = vmatpush.msra.mxu0 %v742
    %808 = vmatpush.msra.mxu0 %v739
    %809 = vmatpush.msra.mxu0 %v736
    %810 = vmatpush.msra.mxu0 %v733
    %811 = vmatpush.msra.mxu0 %v730
    %812 = vmatpush.msra.mxu0 %v727
    %813 = vmatpush.msra.mxu0 %v724
    %814 = vmatpush.msra.mxu0 %v721
    %815 = vmatpush.msra.mxu0 %v718
    %816 = vmatpush.msra.mxu0 %v715
    %817 = vmatpush.msra.mxu0 %v712
    %818 = vmatpush.msra.mxu0 %v709
    %819 = vmatmul.f32.gmra.mxu0 %v705
    %v820 = vpop.f32.mrf.mxu0
    %v821 = vadd.f32 %v759, %v820
    %822 = vdwg.mxu0
    %v823 = vld [vmem:[%s8] sm:$0x1]
    %v824 = vperm.slane %v823, 0
    %v825 = vmul.f32 %v781, %v824
    %v826 = vld [vmem:[%s8 + $0x1] sm:$0x1]
    %v827 = vperm.slane %v826, 0
    %v828 = vadd.f32 %v825, %v827
    %v829 = vmax.f32 %v828, 0.0
    %v830 = vld [vmem:[%s8 + $0x2] sm:$0x1]
    %v831 = vperm.slane %v830, 0
    %v832 = vmul.f32 %v801, %v831
    %v833 = vld [vmem:[%s8 + $0x3] sm:$0x1]
    %v834 = vperm.slane %v833, 0
    %v835 = vadd.f32 %v832, %v834
    %v836 = vmax.f32 %v835, 0.0
    %v837 = vld [vmem:[%s9] sm:$0xff]
    %v838 = vld [vmem:[%s9 + $0x8] sm:$0xff]
    %v839 = vld [vmem:[%s9 + $0x10] sm:$0xff]
    %v840 = vld [vmem:[%s9 + $0x18] sm:$0xff]
    %v841 = vld [vmem:[%s9 + $0x20] sm:$0xff]
    %v842 = vld [vmem:[%s9 + $0x28] sm:$0xff]
    %v843 = vld [vmem:[%s9 + $0x30] sm:$0xff]
    %v844 = vld [vmem:[%s9 + $0x38] sm:$0xff]
    %v845 = vld [vmem:[%s9 + $0x40] sm:$0xff]
    %v846 = vld [vmem:[%s9 + $0x48] sm:$0xff]
    %v847 = vld [vmem:[%s9 + $0x50] sm:$0xff]
    %v848 = vld [vmem:[%s9 + $0x58] sm:$0xff]
    %v849 = vld [vmem:[%s9 + $0x60] sm:$0xff]
    %v850 = vld [vmem:[%s9 + $0x68] sm:$0xff]
    %v851 = vld [vmem:[%s9 + $0x70] sm:$0xff]
    %v852 = vld [vmem:[%s9 + $0x78] sm:$0xff]
    %v853 = vld [vmem:[%s10] sm:$0x1]
    %v855 = vperm.slane %v853, 0
    %857 = vmatpush.msra.mxu0 %v852
    %858 = vmatpush.msra.mxu0 %v851
    %859 = vmatpush.msra.mxu0 %v850
    %860 = vmatpush.msra.mxu0 %v849
    %861 = vmatpush.msra.mxu0 %v848
    %862 = vmatpush.msra.mxu0 %v847
    %863 = vmatpush.msra.mxu0 %v846
    %864 = vmatpush.msra.mxu0 %v845
    %865 = vmatpush.msra.mxu0 %v844
    %866 = vmatpush.msra.mxu0 %v843
    %867 = vmatpush.msra.mxu0 %v842
    %868 = vmatpush.msra.mxu0 %v841
    %869 = vmatpush.msra.mxu0 %v840
    %870 = vmatpush.msra.mxu0 %v839
    %871 = vmatpush.msra.mxu0 %v838
    %872 = vmatpush.msra.mxu0 %v837
    %873 = vmatmul.f32.gmra.mxu0 %v836
    %v874 = vpop.f32.mrf.mxu0
    %v875 = vadd.f32 %v855, %v874
    %876 = vdwg.mxu0
    %v879 = vrot.slane %v836, 6
    %vm880 = vcmask 1041408
    %v881 = vsel %vm880, %v829, %v879
    %883 = vst [vmem:[#allocation4] sm:$0xf] %v881
    %vm884 = vcmask 123904
    %v885 = vsel %vm884, %v821, -inf
    %886 = vmax.xlane.f32.xlu0 %v885
    %v887 = vpop.xlane.xlu0 %886
    %v888 = vsub.f32 %v821, %v887
    %v889 = vmul.f32 %v888, 1.442695
    %v890 = vpow.pop %v889
    %v891 = vsel %vm884, %v890, 0.0
    %892 = vadd.xlane.f32.xlu0 %v891
    %v893 = vpop.xlane.xlu0 %892
    %v894 = vrcp.pop %v893
    %v895 = vmul.f32 %v890, %v894
    %v896 = vlog2.pop %v893
    %v897 = vmul.f32 %v896, 0.6931472
    %v898 = vsub.f32 %v888, %v897
    %v899 = vsel %vm884, %v875, -inf
    %900 = vmax.xlane.f32.xlu0 %v899
    %v901 = vpop.xlane.xlu0 %900
    %v902 = vsub.f32 %v875, %v901
    %v903 = vmul.f32 %v902, 1.442695
    %v904 = vpow.pop %v903
    %v905 = vsel %vm884, %v904, 0.0
    %906 = vadd.xlane.f32.xlu0 %v905
    %v907 = vpop.xlane.xlu0 %906
    %v908 = vrcp.pop %v907
    %v909 = vmul.f32 %v904, %v908
    %v910 = vlog2.pop %v907
    %v911 = vmul.f32 %v910, 0.6931472
    %v912 = vsub.f32 %v902, %v911
    %914 = vrot.lane.b32.xlu0 %v895, 16
    %v915 = vpop.permute.xlu0 %914
    %918 = vrot.lane.b32.xlu0 %v898, 32
    %v919 = vpop.permute.xlu0 %918
    %922 = vrot.lane.b32.xlu0 %v875, 48
    %v923 = vpop.permute.xlu0 %922
    %926 = vrot.lane.b32.xlu0 %v909, 64
    %v927 = vpop.permute.xlu0 %926
    %930 = vrot.lane.b32.xlu0 %v912, 80
    %v931 = vpop.permute.xlu0 %930
    %vm933 = vcmask 130048
    %v934 = vsel %vm933, %v821, %v915
    %v935 = vsel %vm681, %v934, %v919
    %vm936 = vcmask 392192
    %v937 = vsel %vm936, %v935, %v923
    %vm938 = vcmask 523264
    %v939 = vsel %vm938, %v937, %v927
    %vm940 = vcmask 654336
    %v941 = vsel %vm940, %v939, %v931
    %vm942 = vcmask 785408
    %v943 = vsel %vm942, %v941, 0.0
    %944 = vst [vmem:[#allocation6] sm:$0x3] %v943
    // Predicated region
    $region46: #{tpu_custom_call.1} parent=1 // pred_check
      _
    $region47: #{tpu_custom_call.1} parent=1 // pred_check_branch
      %946 = sbr.rel (0) target = $region49
    $region48: #{tpu_custom_call.1} parent=1 // pred_region
      %948 = vsyncadd [#allocation3], 0
      %s950 = sshll.u32 [#allocation2], 4
      %s951 = int_to_ptr.vmem [resolvable:$true] %s950
      %s952 = sshll.u32 %s11, 4
      %s953 = int_to_ptr.hbm [resolvable:$true] %s952
      %955 = dma.vmem_to_hbm [thread:$0]  %s951, 32, %s953, [#allocation3]
    $region49: #{tpu_custom_call.1} parent=1 // pred_fallthru
      _
    // Predicated region
    $region50: #{tpu_custom_call.1} parent=1 // pred_check
      _
    $region51: #{tpu_custom_call.1} parent=1 // pred_check_branch
      %957 = sbr.rel (0) target = $region53
    $region52: #{tpu_custom_call.1} parent=1 // pred_region
      %959 = vsyncadd [#allocation5], 0
      %s961 = sshll.u32 [#allocation4], 4
      %s962 = int_to_ptr.vmem [resolvable:$true] %s961
      %s963 = sshll.u32 %s12, 4
      %s964 = int_to_ptr.hbm [resolvable:$true] %s963
      %966 = dma.vmem_to_hbm [thread:$0]  %s962, 64, %s964, [#allocation5]
    $region53: #{tpu_custom_call.1} parent=1 // pred_fallthru
      _
    // Predicated region
    $region54: #{tpu_custom_call.1} parent=1 // pred_check
      _
    $region55: #{tpu_custom_call.1} parent=1 // pred_check_branch
      %968 = sbr.rel (0) target = $region57
    $region56: #{tpu_custom_call.1} parent=1 // pred_region
      %970 = vsyncadd [#allocation5], 0
      %s972 = sshll.u32 [#allocation6], 4
      %s973 = int_to_ptr.vmem [resolvable:$true] %s972
      %s974 = sshll.u32 %s13, 4
      %s975 = int_to_ptr.hbm [resolvable:$true] %s974
      %977 = dma.vmem_to_hbm [thread:$0]  %s973, 32, %s975, [#allocation5]
    $region57: #{tpu_custom_call.1} parent=1 // pred_fallthru
      _
    // Predicated region
    $region58: #{tpu_custom_call.1} parent=1 // pred_check
      _
    $region59: #{tpu_custom_call.1} parent=1 // pred_check_branch
      %979 = sbr.rel (0) target = $region61
    $region60: #{tpu_custom_call.1} parent=1 // pred_region
      %981 = dma.done [#allocation3], 32
    $region61: #{tpu_custom_call.1} parent=1 // pred_fallthru
      _
    // Predicated region
    $region62: #{tpu_custom_call.1} parent=1 // pred_check
      _
    $region63: #{tpu_custom_call.1} parent=1 // pred_check_branch
      %983 = sbr.rel (0) target = $region65
    $region64: #{tpu_custom_call.1} parent=1 // pred_region
      %985 = dma.done [#allocation5], 64
    $region65: #{tpu_custom_call.1} parent=1 // pred_fallthru
      _
    // Predicated region
    $region66: #{tpu_custom_call.1} parent=1 // pred_check
      _
    $region67: #{tpu_custom_call.1} parent=1 // pred_check_branch
      %987 = sbr.rel (0) target = $region69
    $region68: #{tpu_custom_call.1} parent=1 // pred_region
      %989 = dma.done [#allocation5], 32
    $region69: #{tpu_custom_call.1} parent=1 // pred_fallthru
      _
    %990 = vsyncpa [#allocation3], 1
    %991 = vsyncpa [#allocation5], 1

</llo_original>
